<compile_context>
chip_gen: v7x
topology: tpu7x:2x2x1
jax: 0.10.0
libtpu: 0.0.40
codegen_flags: <defaults>
</compile_context>

<pallas_src>
import jax
import jax.numpy as jnp
from jax.experimental import pallas as pl
from jax.experimental.pallas import tpu as pltpu


# ----------------------------------------------------------------------------- 
# helpers
# -----------------------------------------------------------------------------
def _round_up(x, m):
    return ((x + m - 1) // m) * m


def _cdiv(a, b):
    return -(-a // b)


def _sublane_multiple(dtype):
    # native (sublane, 128) packing: f32 -> 8, bf16 -> 16, int8/fp8 -> 32
    return {4: 8, 2: 16, 1: 32}.get(jnp.dtype(dtype).itemsize, 8)


def _vmem_budget_bytes():
    """~75% of physical VMEM; conservative 64 MiB fallback (v7x)."""
    try:
        cap = pltpu.get_tpu_info().vmem_capacity_bytes
    except Exception:
        cap = 64 * 2 ** 20
    return int(cap) * 3 // 4


# -----------------------------------------------------------------------------
# weight preparation (hoist out of the per-call hot path)
# -----------------------------------------------------------------------------
def prepare_weight(w, compute_dtype=None):
    """One-time weight prep.

    w: (H, in_dim) torch nn.Linear layout, H = 2*out_dim//3 (divisible by 4).

    Returns (w_mat, dup_in_kernel):
      * h4 % 128 == 0 -> w_mat = w.T (in_dim, H); q/k duplication is done with
        lane-aligned stores inside the kernel (no extra MXU work).
      * otherwise     -> w_mat = [Wq, Wk, Wk, Wq, Wv] (in_dim, out_dim);
        kernel is a plain matmul (duplication baked in once, at init).
    """
    H, in_dim = w.shape
    assert H % 4 == 0, "2*out_dim//3 must be divisible by 4"
    h4 = H // 4
    w_t = jnp.asarray(w).T                      # (in_dim, H)
    if compute_dtype is not None:
        w_t = w_t.astype(compute_dtype)
    if h4 % 128 == 0:
        return w_t, True
    wq = w_t[:, :h4]
    wk = w_t[:, h4:2 * h4]
    wv = w_t[:, 2 * h4:]
    return jnp.concatenate((wq, wk, wk, wq, wv), axis=1), False


# -----------------------------------------------------------------------------
# kernels
# -----------------------------------------------------------------------------
def _write_out(o_ref, y, h4, dup):
    if not dup:
        o_ref[...] = y
        return
    # y = [q | k | v] (width 4*h4);  out = [q | k | k | q | v] (width 6*h4).
    # All offsets are multiples of h4 (multiple of 128 on the fast path), so
    # these are plain lane-dense, unmasked VMEM stores.
    q = y[:, 0 * h4:1 * h4]
    k = y[:, 1 * h4:2 * h4]
    v = y[:, 2 * h4:4 * h4]
    o_ref[:, 0 * h4:1 * h4] = q
    o_ref[:, 1 * h4:2 * h4] = k
    o_ref[:, 2 * h4:3 * h4] = k
    o_ref[:, 3 * h4:4 * h4] = q
    o_ref[:, 4 * h4:6 * h4] = v


def _single_k_kernel(h4, dup):
    # One K step: no accumulator scratch needed at all.
    def kernel(x_ref, w_ref, o_ref):
        y = jnp.dot(x_ref[...], w_ref[...], preferred_element_type=jnp.float32)
        _write_out(o_ref, y.astype(o_ref.dtype), h4, dup)
    return kernel


def _multi_k_kernel(h4, dup):
    def kernel(x_ref, w_ref, o_ref, acc_ref):
        ki = pl.program_id(1)

        @pl.when(ki == 0)
        def _():
            acc_ref[...] = jnp.zeros_like(acc_ref)

        acc_ref[...] += jnp.dot(x_ref[...], w_ref[...],
                                preferred_element_type=jnp.float32)

        @pl.when(ki == pl.num_programs(1) - 1)
        def _():
            _write_out(o_ref, acc_ref[...].astype(o_ref.dtype), h4, dup)
    return kernel


# -----------------------------------------------------------------------------
# wrapper
# -----------------------------------------------------------------------------
def dual_fixed_linear(x, w=None, *, prepared=None, tm=512, tk=512,
                      compute_dtype=None, vmem_budget_bytes=None):
    """DualFixedLinear forward.

    x        : (..., in_dim)
    w        : (H, in_dim) torch nn.Linear weight (used if `prepared` is None)
    prepared : result of prepare_weight(w, ...) -- pass this to hoist weight
               prep out of the hot path.
    Returns (..., out_dim) with columns [q, k, k, q, v].
    """
    if prepared is None:
        assert w is not None, "pass either w or prepared"
        prepared = prepare_weight(w, compute_dtype)
    w_mat, dup = prepared
    in_dim_w, w_cols = w_mat.shape
    if dup:
        H = w_cols
        out_dim = 3 * H // 2
    else:
        out_dim = w_cols
        H = 2 * out_dim // 3
    h4 = H // 4

    orig_shape = x.shape
    in_dim = orig_shape[-1]
    assert in_dim == in_dim_w, "weight in_dim mismatch"

    out_dtype = x.dtype
    cdt = compute_dtype if compute_dtype is not None else w_mat.dtype
    if x.dtype != cdt:
        x = x.astype(cdt)
    if w_mat.dtype != cdt:
        w_mat = w_mat.astype(cdt)

    N = 1
    for d in orig_shape[:-1]:
        N *= d
    x2 = x.reshape(N, in_dim)

    x_bytes = jnp.dtype(x2.dtype).itemsize
    w_bytes = jnp.dtype(w_mat.dtype).itemsize
    o_bytes = jnp.dtype(out_dtype).itemsize
    sub = _sublane_multiple(x2.dtype)

    budget = (vmem_budget_bytes if vmem_budget_bytes is not None
              else _vmem_budget_bytes())

    # ---- K tile: prefer a 128-multiple divisor of in_dim (no padding). ----
    def pick_tk(cap):
        if in_dim <= cap:
            return in_dim
        c = (cap // 128) * 128
        while c >= 128:
            if in_dim % c == 0:
                return c
            c -= 128
        return max((cap // 128) * 128, 128)   # no nice divisor -> zero-pad K

    tk_eff = pick_tk(tk)

    # ---- Row tile: sublane-packed, no host-side row padding (cdiv grid). ----
    if N <= tm:
        tm_eff = N
    else:
        tm_eff = max(sub, (tm // sub) * sub)

    def vmem_est(tm_, tk_):
        nk_ = _cdiv(_round_up(in_dim, tk_), tk_) if in_dim > tk_ else 1
        e = (2 * tm_ * tk_ * x_bytes            # x tile (double-buffered)
             + 2 * tk_ * w_cols * w_bytes       # weight tile (double-buffered)
             + 2 * tm_ * out_dim * o_bytes)     # out tile (double-buffered)
        if nk_ > 1:
            e += tm_ * w_cols * 4               # f32 accumulator scratch
        return e

    # Shrink tiles until they fit the per-chip VMEM budget (v7x: 64 MiB phys).
    while vmem_est(tm_eff, tk_eff) > budget and tm_eff > sub:
        tm_eff = max(sub, (tm_eff // 2 // sub) * sub)
    while vmem_est(tm_eff, tk_eff) > budget and tk_eff > 128:
        tk_eff = max(128, pick_tk(tk_eff // 2))

    # ---- K zero-padding only in the rare non-divisible case. ----
    if in_dim % tk_eff != 0:
        k_total = _round_up(in_dim, tk_eff)
        x2 = jnp.pad(x2, ((0, 0), (0, k_total - in_dim)))
        w_mat = jnp.pad(w_mat, ((0, k_total - in_dim), (0, 0)))
    else:
        k_total = in_dim
    n_k = k_total // tk_eff

    grid_rows = _cdiv(N, tm_eff)

    if n_k == 1:
        kernel = _single_k_kernel(h4, dup)
        scratch = []
    else:
        kernel = _multi_k_kernel(h4, dup)
        scratch = [pltpu.VMEM((tm_eff, w_cols), jnp.float32)]

    vmem_limit = int(min(budget,
                         max(32 * 2 ** 20, vmem_est(tm_eff, tk_eff) * 3 // 2)))

    flops = 2 * N * in_dim * w_cols
    bytes_accessed = (N * in_dim * x_bytes + in_dim * w_cols * w_bytes
                      + N * out_dim * o_bytes)

    out2 = pl.pallas_call(
        kernel,
        out_shape=jax.ShapeDtypeStruct((N, out_dim), out_dtype),
        grid_spec=pltpu.PrefetchScalarGridSpec(
            num_scalar_prefetch=0,
            grid=(grid_rows, n_k),
            in_specs=[
                pl.BlockSpec((tm_eff, tk_eff), lambda i, k: (i, k)),
                pl.BlockSpec((tk_eff, w_cols), lambda i, k: (k, 0)),
            ],
            out_specs=pl.BlockSpec((tm_eff, out_dim), lambda i, k: (i, 0)),
            scratch_shapes=scratch,
        ),
        compiler_params=pltpu.CompilerParams(
            dimension_semantics=("parallel", "arbitrary"),
            vmem_limit_bytes=vmem_limit,
        ),
        cost_estimate=pl.CostEstimate(flops=flops, transcendentals=0,
                                      bytes_accessed=bytes_accessed),
    )(x2, w_mat)

    return out2.reshape(orig_shape[:-1] + (out_dim,))


# -----------------------------------------------------------------------------
# reference + self-test
# -----------------------------------------------------------------------------
def _reference(x, w):
    y = x @ w.T
    qk, v = jnp.split(y, 2, axis=-1)
    q, k = jnp.split(qk, 2, axis=-1)
    return jnp.concatenate((q, k, k, q, v), axis=-1)


if __name__ == "__main__":
    key = jax.random.PRNGKey(0)
    k1, k2, k3, k4, k5 = jax.random.split(key, 5)

    # --- small shapes consistent with the module: B=2, S=8, in=32, out=48 ---
    B, S, in_dim, out_dim = 2, 8, 32, 48
    H = 2 * out_dim // 3                                    # 32 -> h4 = 8
    x = jax.random.normal(k1, (B, S, in_dim), dtype=jnp.float32)
    bound = 1.0 / (in_dim ** 0.5)
    w = jax.random.uniform(k2, (H, in_dim), dtype=jnp.float32,
                           minval=-bound, maxval=bound)

    prepared = prepare_weight(w)                 # hoisted weight prep (once)
    out = dual_fixed_linear(x, prepared=prepared)
    jax.block_until_ready(out)
    ref = _reference(x, w)
    assert out.shape == (B, S, out_dim)
    assert jnp.allclose(out, ref, atol=1e-5, rtol=1e-5)

    # bf16 compute path (recommended on v6e / v7x), f32 MXU accumulation.
    prepared_bf16 = prepare_weight(w, compute_dtype=jnp.bfloat16)
    out_bf16 = dual_fixed_linear(x, prepared=prepared_bf16)
    jax.block_until_ready(out_bf16)
    assert out_bf16.shape == (B, S, out_dim)
    assert jnp.allclose(out_bf16, ref, atol=1e-1, rtol=1e-1)

    # --- partial last row-tile (N=18, tm=8): exercises the no-padding path ---
    x3 = jax.random.normal(k3, (2, 9, in_dim), dtype=jnp.float32)
    out3 = dual_fixed_linear(x3, prepared=prepared, tm=8)
    jax.block_until_ready(out3)
    assert out3.shape == (2, 9, out_dim)
    assert jnp.allclose(out3, _reference(x3, w), atol=1e-5, rtol=1e-5)

    # --- lane-aligned shapes: fast (un-duplicated weight) path, h4 = 128 ---
    in2, outd2 = 256, 768                                    # H = 512
    H2 = 2 * outd2 // 3
    x2 = jax.random.normal(k4, (B, S, in2), dtype=jnp.float32)
    b2 = 1.0 / (in2 ** 0.5)
    w2 = jax.random.uniform(k5, (H2, in2), dtype=jnp.float32,
                            minval=-b2, maxval=b2)
    prepared2 = prepare_weight(w2)
    ref2 = _reference(x2, w2)

    # (a) multi-step K reduction with the f32 accumulator (tk=128 < in_dim).
    out2a = dual_fixed_linear(x2, prepared=prepared2, tk=128)
    jax.block_until_ready(out2a)
    assert out2a.shape == (B, S, outd2)
    assert jnp.allclose(out2a, ref2, atol=2e-2, rtol=2e-2)

    # (b) single K step (no scratch), in-kernel q/k duplication epilogue.
    out2b = dual_fixed_linear(x2, prepared=prepared2)
    jax.block_until_ready(out2b)
    assert out2b.shape == (B, S, outd2)
    assert jnp.allclose(out2b, ref2, atol=2e-2, rtol=2e-2)

    print("KERNEL_OK")
</pallas_src>

<mosaic_0001>
module attributes {stable_mosaic.version = 11 : i64} {
  func.func @kernel(%arg0: i32, %arg1: i32, %arg2: memref<16x32xf32, #tpu.memory_space<vmem>>, %arg3: memref<32x48xf32, #tpu.memory_space<vmem>>, %arg4: memref<16x48xf32, #tpu.memory_space<vmem>>) attributes {dimension_semantics = [#tpu.dimension_semantics<parallel>, #tpu.dimension_semantics<arbitrary>], iteration_bounds = array<i64: 1, 1>, scalar_prefetch = 0 : i64, scratch_operands = 0 : i64, tpu.core_type = #tpu.core_type<tc>, window_params = [{transform_indices = @transform_0, window_bounds = array<i64: 16, 32>}, {transform_indices = @transform_1, window_bounds = array<i64: 32, 48>}, {transform_indices = @transform_2, window_bounds = array<i64: 16, 48>}]} {
    %c0 = arith.constant 0 : index
    %c0_0 = arith.constant 0 : index
    %0 = vector.load %arg2[%c0, %c0_0] : memref<16x32xf32, #tpu.memory_space<vmem>>, vector<16x32xf32>
    %c0_1 = arith.constant 0 : index
    %c0_2 = arith.constant 0 : index
    %1 = vector.load %arg3[%c0_1, %c0_2] : memref<32x48xf32, #tpu.memory_space<vmem>>, vector<32x48xf32>
    %cst = arith.constant dense<0.000000e+00> : vector<16x48xf32>
    %2 = tpu.matmul %0, %1, %cst {dimension_numbers = #tpu.dot_dimension_numbers<[1], [0], [0], [1], [0, 0, 1, 1], [], []>} : vector<16x32xf32>, vector<32x48xf32>, vector<16x48xf32> -> vector<16x48xf32>
    %c0_3 = arith.constant 0 : index
    %c0_4 = arith.constant 0 : index
    %3 = vector.load %arg4[%c0_3, %c0_4] : memref<16x48xf32, #tpu.memory_space<vmem>>, vector<16x48xf32>
    tpu.vector_store %arg4[%c0_3, %c0_4], %2 {strides = array<i32>} : memref<16x48xf32, #tpu.memory_space<vmem>>, vector<16x48xf32>,
    return
  }
  func.func @transform_0(%arg0: i32, %arg1: i32) -> (i32, i32) {
    %c0_i32 = arith.constant 0 : i32
    return %arg0, %arg1 : i32, i32
  }
  func.func @transform_1(%arg0: i32, %arg1: i32) -> (i32, i32) {
    %c0_i32 = arith.constant 0 : i32
    %c0_i32_0 = arith.constant 0 : i32
    return %arg1, %c0_i32 : i32, i32
  }
  func.func @transform_2(%arg0: i32, %arg1: i32) -> (i32, i32) {
    %c0_i32 = arith.constant 0 : i32
    %c0_i32_0 = arith.constant 0 : i32
    return %arg0, %c0_i32 : i32, i32
  }
}

</mosaic_0001>

<llo_original>
// kernel: tpu_custom_call.1
$region0: #{tpu_custom_call.1}
  #allocation0 [shape = 'u32[]', space=smem, size = 0x4, offset = 0x4, fixed_abs, tag = 'smem constant byte address 0x4 - core index']
  #allocation1 [shape = 'u32[144,128]{1,0:T(1,128)}', space=vmem, size = 0x12000, scoped, tag = 'internal scratch']
  %s0 = inlined_call_operand.hbm [shape: f32[16,32], index: 0, kind: input, shape index: {}]
  %s1 = inlined_call_operand.hbm [shape: f32[32,48], index: 1, kind: input, shape index: {}]
  %s2 = inlined_call_operand.hbm [shape: f32[16,48], index: 2, kind: output, shape index: {}]
  %s3 = sld [smem:[#allocation0]]
  $region26: #{tpu_custom_call.1} parent=0
    _
  %s5 = ssub.s32 1, %s3
  %s6 = scalar_select 0, %s5, %s3
  $region1: #{tpu_custom_call.1} parent=0
    #allocation2 [shape = 'u8[8192]{0}', space=vmem, size = 0x2000, scoped, tag = 'input window, operand 0, single buffered']
    #allocation3 [shape = 's32[1]{0}', space=sflag, size = 0x4, scoped, tag = 'scoped memory for tpu_custom_call.1']
    #allocation4 [shape = 's32[1]{0}', space=sflag, size = 0x4, scoped, tag = 'scoped memory for tpu_custom_call.1']
    #allocation5 [shape = 'u8[16384]{0}', space=vmem, size = 0x4000, scoped, tag = 'input window, operand 1, single buffered']
    #allocation6 [shape = 's32[1]{0}', space=sflag, size = 0x4, scoped, tag = 'scoped memory for tpu_custom_call.1']
    #allocation7 [shape = 'u8[8192]{0}', space=vmem, size = 0x2000, scoped, tag = 'output window, operand 0, single buffered']
    %7 = vsyncpa [#allocation3], 0
    %8 = vsyncpa [#allocation6], 0
    %9 = vsyncpa [#allocation4], 0
    // Predicated region
    $region2: #{tpu_custom_call.1} parent=1 // pred_check
      _
    $region3: #{tpu_custom_call.1} parent=1 // pred_check_branch
      %11 = sbr.rel (0) target = $region5
    $region4: #{tpu_custom_call.1} parent=1 // pred_region
      %s13 = ssub.s32 256, 256
      %14 = vsyncadd [#allocation3], %s13
      %s15 = sshll.u32 [#allocation2], 4
      %s16 = int_to_ptr.vmem [resolvable:$true] %s15
      %21 = dma.hbm_to_vmem [thread:$0]  %s0, 256, %s16, [#allocation3], 128, 128, 8
    $region5: #{tpu_custom_call.1} parent=1 // pred_fallthru
      _
    // Predicated region
    $region6: #{tpu_custom_call.1} parent=1 // pred_check
      _
    $region7: #{tpu_custom_call.1} parent=1 // pred_check_branch
      %23 = sbr.rel (0) target = $region9
    $region8: #{tpu_custom_call.1} parent=1 // pred_region
      %s25 = ssub.s32 512, 512
      %26 = vsyncadd [#allocation6], %s25
      %s27 = sshll.u32 [#allocation5], 4
      %s28 = int_to_ptr.vmem [resolvable:$true] %s27
      %33 = dma.hbm_to_vmem [thread:$0]  %s1, 512, %s28, [#allocation6], 128, 128, 8
    $region9: #{tpu_custom_call.1} parent=1 // pred_fallthru
      _
    // Predicated region
    $region10: #{tpu_custom_call.1} parent=1 // pred_check
      _
    $region11: #{tpu_custom_call.1} parent=1 // pred_check_branch
      %35 = sbr.rel (0) target = $region13
    $region12: #{tpu_custom_call.1} parent=1 // pred_region
      %36 = dma.done [#allocation3], 256
    $region13: #{tpu_custom_call.1} parent=1 // pred_fallthru
      _
    // Predicated region
    $region14: #{tpu_custom_call.1} parent=1 // pred_check
      _
    $region15: #{tpu_custom_call.1} parent=1 // pred_check_branch
      %38 = sbr.rel (0) target = $region17
    $region16: #{tpu_custom_call.1} parent=1 // pred_region
      %39 = dma.done [#allocation6], 512
    $region17: #{tpu_custom_call.1} parent=1 // pred_fallthru
      _
    %v40 = vld [vmem:[#allocation2] sm:$0xff]
    %v41 = vld [vmem:[#allocation2 + $0x8] sm:$0xff]
    %v42 = vld [vmem:[#allocation5] sm:$0xff]
    %v43 = vld [vmem:[#allocation5 + $0x8] sm:$0xff]
    %v44 = vld [vmem:[#allocation5 + $0x10] sm:$0xff]
    %v45 = vld [vmem:[#allocation5 + $0x18] sm:$0xff]
    %vm46 = vcmask 261120
    %v48 = vsel %vm46, %v40, 0
    %v51 = vsel %vm46, %v41, 0
    %53 = vmatprep.subr.mxu0 0.0
    %54 = vmatpush1.msra.mxu0 %v42
    %55 = vmatprep.subr.mxu0 0.0
    %56 = vmatpush1.msra.mxu0 %v43
    %57 = vmatprep.subr.mxu0 0.0
    %58 = vmatpush1.msra.mxu0 %v44
    %59 = vmatprep.subr.mxu0 0.0
    %60 = vmatpush1.msra.mxu0 %v45
    %61 = vmatprep.subr.mxu0 0.0
    %62 = vmatpush1.msra.mxu0 0.0
    %63 = vmatprep.subr.mxu0 0.0
    %64 = vmatpush1.msra.mxu0 0.0
    %65 = vmatprep.subr.mxu0 0.0
    %66 = vmatpush1.msra.mxu0 0.0
    %67 = vmatprep.subr.mxu0 0.0
    %68 = vmatpush1.msra.mxu0 0.0
    %69 = vmatprep.subr.mxu0 0.0
    %70 = vmatpush1.msra.mxu0 0.0
    %71 = vmatprep.subr.mxu0 0.0
    %72 = vmatpush1.msra.mxu0 0.0
    %73 = vmatprep.subr.mxu0 0.0
    %74 = vmatpush1.msra.mxu0 0.0
    %75 = vmatprep.subr.mxu0 0.0
    %76 = vmatpush1.msra.mxu0 0.0
    %77 = vmatprep.subr.mxu0 0.0
    %78 = vmatpush1.msra.mxu0 0.0
    %79 = vmatprep.subr.mxu0 0.0
    %80 = vmatpush1.msra.mxu0 0.0
    %81 = vmatprep.subr.mxu0 0.0
    %82 = vmatpush1.msra.mxu0 0.0
    %83 = vmatprep.subr.mxu0 0.0
    %84 = vmatpush1.msra.mxu0 0.0
    %85 = vmatprep.subr.mxu0 0.0
    %86 = vmatpush1.msra.mxu0 0.0
    %87 = vmatprep.subr.mxu0 0.0
    %88 = vmatpush1.msra.mxu0 0.0
    %89 = vmatprep.subr.mxu0 0.0
    %90 = vmatpush1.msra.mxu0 0.0
    %91 = vmatprep.subr.mxu0 0.0
    %92 = vmatpush1.msra.mxu0 0.0
    %93 = vmatprep.subr.mxu0 0.0
    %94 = vmatpush1.msra.mxu0 0.0
    %95 = vmatprep.subr.mxu0 0.0
    %96 = vmatpush1.msra.mxu0 0.0
    %97 = vmatprep.subr.mxu0 0.0
    %98 = vmatpush1.msra.mxu0 0.0
    %99 = vmatprep.subr.mxu0 0.0
    %100 = vmatpush1.msra.mxu0 0.0
    %101 = vmatprep.subr.mxu0 0.0
    %102 = vmatpush1.msra.mxu0 0.0
    %103 = vmatprep.subr.mxu0 0.0
    %104 = vmatpush1.msra.mxu0 0.0
    %105 = vmatprep.subr.mxu0 0.0
    %106 = vmatpush1.msra.mxu0 0.0
    %107 = vmatprep.subr.mxu0 0.0
    %108 = vmatpush1.msra.mxu0 0.0
    %109 = vmatprep.subr.mxu0 0.0
    %110 = vmatpush1.msra.mxu0 0.0
    %111 = vmatprep.subr.mxu0 0.0
    %112 = vmatpush1.msra.mxu0 0.0
    %113 = vmatprep.subr.mxu0 0.0
    %114 = vmatpush1.msra.mxu0 0.0
    %115 = vmatprep.subr.mxu0 0.0
    %116 = vmatpush1.msra.mxu0 0.0
    %117 = vmatprep.mubr.f32.mxu0 0.0
    %118 = vmatmul.mubr.f32.gmra.mrb[0].mxu0 %v48
    %v119 = vpop.f32.mrb[0].mxu0
    %v120 = vadd.f32 0.0, %v119
    %v121 = vpop.f32.mrb[0].mxu0
    %122 = vmatprep.mubr.f32.mxu0 0.0
    %123 = vmatmul.mubr.f32.gmra.mrb[0].mxu0 %v51
    %v124 = vpop.f32.mrb[0].mxu0
    %v125 = vadd.f32 0.0, %v124
    %v126 = vpop.f32.mrb[0].mxu0
    %127 = vdwg.mxu0
    %vm128 = vcmask 392192
    %129 = vst.msk [vmem:[#allocation7] sm:$0xff] %vm128, %v120
    %130 = vst.msk [vmem:[#allocation7 + $0x8] sm:$0xff] %vm128, %v125
    // Predicated region
    $region18: #{tpu_custom_call.1} parent=1 // pred_check
      _
    $region19: #{tpu_custom_call.1} parent=1 // pred_check_branch
      %132 = sbr.rel (0) target = $region21
    $region20: #{tpu_custom_call.1} parent=1 // pred_region
      %s134 = ssub.s32 256, 256
      %135 = vsyncadd [#allocation4], %s134
      %s136 = sshll.u32 [#allocation7], 4
      %s137 = int_to_ptr.vmem [resolvable:$true] %s136
      %142 = dma.vmem_to_hbm [thread:$0]  %s137, 256, %s2, [#allocation4], 128, 128, 8
    $region21: #{tpu_custom_call.1} parent=1 // pred_fallthru
      _
    // Predicated region
    $region22: #{tpu_custom_call.1} parent=1 // pred_check
      _
    $region23: #{tpu_custom_call.1} parent=1 // pred_check_branch
      %144 = sbr.rel (0) target = $region25
    $region24: #{tpu_custom_call.1} parent=1 // pred_region
      %145 = dma.done [#allocation4], 256
    $region25: #{tpu_custom_call.1} parent=1 // pred_fallthru
      _
    %146 = vsyncpa [#allocation3], 1
    %147 = vsyncpa [#allocation6], 1
    %148 = vsyncpa [#allocation4], 1

</llo_original>
